<compile_context>
chip_gen: v6e
topology: v6e:2x2x1
jax: 0.10.0
libtpu: 0.0.40
codegen_flags: <defaults>
</compile_context>

<pallas_src>
import functools

import jax
import jax.numpy as jnp
from jax.experimental import pallas as pl
from jax.experimental.pallas import tpu as pltpu


def _conv_gemm_kernel(xcol_ref, w_ref, o_ref):
    """One batch image per grid step: 3x3 conv as a single im2col GEMM.

    xcol_ref: (1, K, P)    im2col'd input, K = Cin*3*3, P = H*W   (VMEM)
    w_ref:    (Cout, K)    flattened conv weight (resident across steps, VMEM)
    o_ref:    (1, Cout, P) output tile, lane dim P is 128-aligned (VMEM)
    """
    o_ref[0] = jnp.dot(
        w_ref[...], xcol_ref[0], preferred_element_type=jnp.float32
    ).astype(o_ref.dtype)


@functools.partial(jax.jit, static_argnames=())
def conv2d_3x3_same_nobias(x_nchw, w_oihw):
    """Conv2d(Cin, Cout, 3, stride=1, pad=1, bias=False) via a Pallas GEMM kernel."""
    N, Cin, H, W = x_nchw.shape
    Cout, Cin2, KH, KW = w_oihw.shape
    assert (KH, KW) == (3, 3) and Cin2 == Cin
    P = H * W
    K = Cin * KH * KW

    x = x_nchw.astype(jnp.float32)
    w = w_oihw.astype(jnp.float32)

    # ---- wrapper-side im2col (layout plumbing only, no arithmetic) ----
    xp = jnp.pad(x, ((0, 0), (0, 0), (1, 1), (1, 1)))           # SAME padding
    taps = [
        xp[:, :, kh:kh + H, kw:kw + W].reshape(N, Cin, 1, P)
        for kh in range(KH)
        for kw in range(KW)
    ]
    # K index = ci*9 + kh*3 + kw  (matches row-major flatten of OIHW weight)
    xcol = jnp.concatenate(taps, axis=2).reshape(N, K, P)
    w_mat = w.reshape(Cout, K)

    out = pl.pallas_call(
        _conv_gemm_kernel,
        out_shape=jax.ShapeDtypeStruct((N, Cout, P), jnp.float32),
        grid=(N,),
        in_specs=[
            pl.BlockSpec((1, K, P), lambda n: (n, 0, 0)),
            pl.BlockSpec((Cout, K), lambda n: (0, 0)),   # constant -> stays resident
        ],
        out_specs=pl.BlockSpec((1, Cout, P), lambda n: (n, 0, 0)),
        compiler_params=pltpu.CompilerParams(
            dimension_semantics=("parallel",),
        ),
    )(xcol, w_mat)

    # (N, Cout, H*W) -> (N, Cout, H, W): already NCHW, just a reshape.
    return out.reshape(N, Cout, H, W)


def indirect_module_caller_forward(img, conv_immediate_weight, module_for_indirection=None):
    """IndirectModuleCaller.forward.

    module_for_indirection: optional JAX callable standing in for the injected
    nn.Module (identity if None).  conv_immediate_weight: (32, 32, 3, 3) OIHW.
    """
    enc_features = img if module_for_indirection is None else module_for_indirection(img)
    return conv2d_3x3_same_nobias(enc_features, conv_immediate_weight)


if __name__ == "__main__":
    key = jax.random.PRNGKey(0)
    k_x, k_w = jax.random.split(key)

    # Shapes implied by Conv2d(32, 32, 3, 1, 1): NCHW with C=32.
    N, C, H, W = 2, 32, 16, 16
    img = jax.random.normal(k_x, (N, C, H, W), dtype=jnp.float32)

    # conv_immediate default PyTorch init: U(-b, b), b = 1/sqrt(fan_in).
    fan_in = C * 3 * 3
    bound = 1.0 / (fan_in ** 0.5)
    conv_w = jax.random.uniform(
        k_w, (32, 32, 3, 3), minval=-bound, maxval=bound, dtype=jnp.float32
    )

    out = indirect_module_caller_forward(img, conv_w)
    out = jax.block_until_ready(out)

    assert out.shape == (N, 32, H, W)
    assert out.dtype == jnp.float32

    # Reference check against XLA's convolution (same semantics as F.conv2d).
    ref = jax.lax.conv_general_dilated(
        img, conv_w,
        window_strides=(1, 1),
        padding=((1, 1), (1, 1)),
        dimension_numbers=("NCHW", "OIHW", "NCHW"),
    )
    max_err = float(jnp.max(jnp.abs(out - ref)))
    assert jnp.allclose(out, ref, atol=1e-3, rtol=1e-3), max_err

    print("KERNEL_OK")
</pallas_src>

<mosaic_0001>
module attributes {stable_mosaic.version = 11 : i64} {
  func.func @_conv_gemm_kernel(%arg0: i32, %arg1: memref<1x288x256xf32, #tpu.memory_space<vmem>>, %arg2: memref<32x288xf32, #tpu.memory_space<vmem>>, %arg3: memref<1x32x256xf32, #tpu.memory_space<vmem>>) attributes {dimension_semantics = [#tpu.dimension_semantics<parallel>], iteration_bounds = array<i64: 2>, scalar_prefetch = 0 : i64, scratch_operands = 0 : i64, tpu.core_type = #tpu.core_type<tc>, window_params = [{transform_indices = @transform_0, window_bounds = array<i64: 1, 288, 256>}, {pipeline_mode = #tpu.pipeline_mode<synchronous>, transform_indices = @transform_1, window_bounds = array<i64: 32, 288>}, {transform_indices = @transform_2, window_bounds = array<i64: 1, 32, 256>}]} {
    %c0 = arith.constant 0 : index
    %c0_0 = arith.constant 0 : index
    %0 = vector.load %arg2[%c0, %c0_0] : memref<32x288xf32, #tpu.memory_space<vmem>>, vector<32x288xf32>
    %c0_1 = arith.constant 0 : index
    %c0_2 = arith.constant 0 : index
    %c0_3 = arith.constant 0 : index
    %1 = vector.load %arg1[%c0_1, %c0_2, %c0_3] : memref<1x288x256xf32, #tpu.memory_space<vmem>>, vector<1x288x256xf32>
    %2 = vector.shape_cast %1 : vector<1x288x256xf32> to vector<288x256xf32>
    %cst = arith.constant dense<0.000000e+00> : vector<32x256xf32>
    %3 = tpu.matmul %0, %2, %cst {dimension_numbers = #tpu.dot_dimension_numbers<[1], [0], [0], [1], [0, 0, 1, 1], [], []>} : vector<32x288xf32>, vector<288x256xf32>, vector<32x256xf32> -> vector<32x256xf32>
    %c0_4 = arith.constant 0 : index
    %c0_5 = arith.constant 0 : index
    %c0_6 = arith.constant 0 : index
    %4 = vector.load %arg3[%c0_4, %c0_5, %c0_6] : memref<1x32x256xf32, #tpu.memory_space<vmem>>, vector<1x32x256xf32>
    %5 = vector.shape_cast %4 : vector<1x32x256xf32> to vector<32x256xf32>
    %6 = vector.shape_cast %3 : vector<32x256xf32> to vector<1x32x256xf32>
    tpu.vector_store %arg3[%c0_4, %c0_5, %c0_6], %6 {strides = array<i32>} : memref<1x32x256xf32, #tpu.memory_space<vmem>>, vector<1x32x256xf32>,
    return
  }
  func.func @transform_0(%arg0: i32) -> (i32, i32, i32) {
    %c0_i32 = arith.constant 0 : i32
    %c0_i32_0 = arith.constant 0 : i32
    %c0_i32_1 = arith.constant 0 : i32
    return %arg0, %c0_i32, %c0_i32_0 : i32, i32, i32
  }
  func.func @transform_1(%arg0: i32) -> (i32, i32) {
    %c0_i32 = arith.constant 0 : i32
    %c0_i32_0 = arith.constant 0 : i32
    %c0_i32_1 = arith.constant 0 : i32
    return %c0_i32, %c0_i32_0 : i32, i32
  }
  func.func @transform_2(%arg0: i32) -> (i32, i32, i32) {
    %c0_i32 = arith.constant 0 : i32
    %c0_i32_0 = arith.constant 0 : i32
    %c0_i32_1 = arith.constant 0 : i32
    return %arg0, %c0_i32, %c0_i32_0 : i32, i32, i32
  }
}

</mosaic_0001>

<llo_original>
// kernel: conv2d_3x3_same_nobias.1
$region0: #{conv2d_3x3_same_nobias.1}
  #allocation0 [shape = 'u32[]', space=smem, size = 0x4, offset = 0x4, fixed_abs, tag = 'smem constant byte address 0x4 - core index']
  #allocation1 [shape = 'u32[144,128]{1,0:T(1,128)}', space=vmem, size = 0x12000, scoped, tag = 'internal scratch']
  %s0 = inlined_call_operand.vmem [shape: f32[2,288,256], index: 0, kind: input, shape index: {}]
  %s1 = inlined_call_operand.vmem [shape: f32[32,288], index: 1, kind: input, shape index: {}]
  %s2 = inlined_call_operand.vmem [shape: f32[2,32,256], index: 2, kind: output, shape index: {}]
  %s3 = sld [smem:[#allocation0]]
  $region41: #{conv2d_3x3_same_nobias.1} parent=0
    _
  %s5 = ssub.s32 1, %s3
  %s6 = scalar_select 0, %s5, %s3
  loop: start=0, step=1, limit=4
  $region2: #{conv2d_3x3_same_nobias.1} parent=0 // loop_pre_header
    _
  $region3: #{conv2d_3x3_same_nobias.1} parent=0 // loop_header
    %s8 = sphi 0, %s12
    %p9 = scmp.ge.s32.totalorder %s8, 4
    %s18 = sphi 0, %s20
    %s21 = sphi 0, %s18
    %s22 = sphi 0, %s21
    %s38 = sphi 0, %s22
    %s42 = sphi 0, %s42
    %s44 = sphi 0, %s42
    %s45 = sphi 0, %s44
    %s59 = sphi 0, %s45
    %s65 = sphi 0, %s67
    %s68 = sphi 0, %s65
    %s69 = sphi 0, %s68
    %s85 = sphi 0, %s69
  $region4: #{conv2d_3x3_same_nobias.1} parent=0 // loop_header_branch
    %11 = sbr.rel (%p9) target = $region8
  $region5: #{conv2d_3x3_same_nobias.1} parent=0 // loop_body
    %s13 = ssub.s32 %s8, 1
    %s14 = ssub.s32 %s8, 2
    %s15 = sadd.s32 %s8, 1
    %s16 = ssub.s32 %s8, %s15
    %p17 = scmp.eq.s32.totalorder %s16, 0
    %s19 = sadd.s32 %s18, 1
    %s20 = scalar_select %p17, %s18, %s19
    %p23 = pneg %p17
    %p24 = scmp.eq.s32.totalorder %s8, 1
    %p25 = por %p23, %p24
    %p26 = scmp.ne.s32.totalorder %s18, %s21
    %p27 = scmp.eq.s32.totalorder %s8, 0
    %p28 = por %p26, %p27
    %p29 = scmp.ne.s32.totalorder %s18, %s21
    %p30 = scmp.eq.s32.totalorder %s13, 1
    %p31 = por %p29, %p30
    %p32 = scmp.ne.s32.totalorder %s21, %s22
    %p33 = scmp.eq.s32.totalorder %s13, 0
    %p34 = por %p32, %p33
    %p35 = scmp.ne.s32.totalorder %s21, %s22
    %p36 = scmp.eq.s32.totalorder %s14, 1
    %p37 = por %p35, %p36
    %p39 = scmp.ne.s32.totalorder %s22, %s38
    %p40 = scmp.eq.s32.totalorder %s14, 0
    %p41 = por %p39, %p40
    %s43 = sadd.s32 %s42, 1
    %p46 = scmp.eq.s32.totalorder %s8, 1
    %p47 = scmp.ne.s32.totalorder %s42, %s44
    %p48 = scmp.eq.s32.totalorder %s8, 0
    %p49 = por %p47, %p48
    %p50 = scmp.ne.s32.totalorder %s42, %s44
    %p51 = scmp.eq.s32.totalorder %s13, 1
    %p52 = por %p50, %p51
    %p53 = scmp.ne.s32.totalorder %s44, %s45
    %p54 = scmp.eq.s32.totalorder %s13, 0
    %p55 = por %p53, %p54
    %p56 = scmp.ne.s32.totalorder %s44, %s45
    %p57 = scmp.eq.s32.totalorder %s14, 1
    %p58 = por %p56, %p57
    %p60 = scmp.ne.s32.totalorder %s45, %s59
    %p61 = scmp.eq.s32.totalorder %s14, 0
    %p62 = por %p60, %p61
    %s63 = ssub.s32 %s8, %s15
    %p64 = scmp.eq.s32.totalorder %s63, 0
    %s66 = sadd.s32 %s65, 1
    %s67 = scalar_select %p64, %s65, %s66
    %p70 = pneg %p64
    %p71 = scmp.eq.s32.totalorder %s8, 1
    %p72 = por %p70, %p71
    %p73 = scmp.ne.s32.totalorder %s65, %s68
    %p74 = scmp.eq.s32.totalorder %s8, 0
    %p75 = por %p73, %p74
    %p76 = scmp.ne.s32.totalorder %s65, %s68
    %p77 = scmp.eq.s32.totalorder %s13, 1
    %p78 = por %p76, %p77
    %p79 = scmp.ne.s32.totalorder %s68, %s69
    %p80 = scmp.eq.s32.totalorder %s13, 0
    %p81 = por %p79, %p80
    %p82 = scmp.ne.s32.totalorder %s68, %s69
    %p83 = scmp.eq.s32.totalorder %s14, 1
    %p84 = por %p82, %p83
    %p86 = scmp.ne.s32.totalorder %s69, %s85
    %p87 = scmp.eq.s32.totalorder %s14, 0
    %p88 = por %p86, %p87
    %p89 = scmp.le.s32.totalorder 1, %s8
    %p90 = scmp.lt.s32.totalorder %s8, 3
    %p91 = pnand %p89, %p90
    %p92 = pneg %p91
    // Predicated region
    $region9: #{conv2d_3x3_same_nobias.1} parent=5 // pred_check
      _
    $region10: #{conv2d_3x3_same_nobias.1} parent=5 // pred_check_branch
      %94 = sbr.rel (%p91) target = $region12
    $region11: #{conv2d_3x3_same_nobias.1} parent=5 // pred_region
      %s95 = ssub.s32 %s8, 1
      // Predicated region
      $region13: #{conv2d_3x3_same_nobias.1} parent=11 // pred_check
        %p96 = pneg %p55
      $region14: #{conv2d_3x3_same_nobias.1} parent=11 // pred_check_branch
        %98 = sbr.rel (%p96) target = $region16
      $region15: #{conv2d_3x3_same_nobias.1} parent=11 // pred_region
        _
      $region16: #{conv2d_3x3_same_nobias.1} parent=11 // pred_fallthru
        _
    $region12: #{conv2d_3x3_same_nobias.1} parent=5 // pred_fallthru
      _
    %p99 = scmp.lt.s32.totalorder %s8, 2
    // Predicated region
    $region17: #{conv2d_3x3_same_nobias.1} parent=5 // pred_check
      %p100 = pneg %p99
    $region18: #{conv2d_3x3_same_nobias.1} parent=5 // pred_check_branch
      %102 = sbr.rel (%p100) target = $region20
    $region19: #{conv2d_3x3_same_nobias.1} parent=5 // pred_region
      // Predicated region
      $region21: #{conv2d_3x3_same_nobias.1} parent=19 // pred_check
        %p103 = pneg %p28
      $region22: #{conv2d_3x3_same_nobias.1} parent=19 // pred_check_branch
        %105 = sbr.rel (%p103) target = $region24
      $region23: #{conv2d_3x3_same_nobias.1} parent=19 // pred_region
        %p106 = scmp.lt.s32.totalorder %s8, 1
        %s107 = scalar_select %p106, %s8, 1
        %s108 = smul.addr %s107, 72
        %s109 = smul.addr %s108, 8
        %s110 = scalar_lea.vmem %s0, %s109
      $region24: #{conv2d_3x3_same_nobias.1} parent=19 // pred_fallthru
        _
    $region20: #{conv2d_3x3_same_nobias.1} parent=5 // pred_fallthru
      _
    %p111 = scmp.le.s32.totalorder 1, %s8
    %p112 = scmp.lt.s32.totalorder %s8, 3
    %p113 = pnand %p111, %p112
    %p114 = pneg %p113
    // Predicated region
    $region25: #{conv2d_3x3_same_nobias.1} parent=5 // pred_check
      _
    $region26: #{conv2d_3x3_same_nobias.1} parent=5 // pred_check_branch
      %116 = sbr.rel (%p113) target = $region28
    $region27: #{conv2d_3x3_same_nobias.1} parent=5 // pred_region
      %s117 = ssub.s32 %s8, 1
      %p118 = scmp.lt.s32.totalorder %s13, 1
      %s119 = scalar_select %p118, %s13, 1
      %s120 = smul.addr %s119, 72
      %s121 = smul.addr %s120, 8
      %s122 = scalar_lea.vmem %s0, %s121
      %p123 = pneg %p34
      %p124 = pneg %p31
      %p125 = pneg %p55
      %p126 = pneg %p52
      %p127 = pneg %p81
      %p128 = pneg %p78
      %p129 = scmp.lt.s32.totalorder %s13, 1
      %s130 = scalar_select %p129, %s13, 1
      %s131 = smul.addr %s130, 8
      %s132 = smul.addr %s131, 8
      %s133 = scalar_lea.vmem %s2, %s132
      %p134 = scmp.lt.s32.totalorder %s13, 1
      %s135 = scalar_select %p134, %s13, 1
      %s136 = smul.addr %s135, 72
      %s137 = smul.addr %s136, 8
      %s138 = scalar_lea.vmem %s0, %s137
      %p139 = scmp.lt.s32.totalorder %s13, 1
      %s140 = scalar_select %p139, %s13, 1
      %s141 = smul.addr %s140, 8
      %s142 = smul.addr %s141, 8
      %s143 = scalar_lea.vmem %s2, %s142
      %v144 = vld [vmem:[%s1] sm:$0xff]
      %v145 = vld [vmem:[%s1 + $0x8] sm:$0xff]
      %v146 = vld [vmem:[%s1 + $0x10] sm:$0xff]
      %v147 = vld [vmem:[%s1 + $0x18] sm:$0xff]
      %v148 = vld [vmem:[%s1 + $0x20] sm:$0xff]
      %v149 = vld [vmem:[%s1 + $0x28] sm:$0xff]
      %v150 = vld [vmem:[%s1 + $0x30] sm:$0xff]
      %v151 = vld [vmem:[%s1 + $0x38] sm:$0xff]
      %v152 = vld [vmem:[%s1 + $0x40] sm:$0xff]
      %v153 = vld [vmem:[%s1 + $0x48] sm:$0xff]
      %v154 = vld [vmem:[%s1 + $0x50] sm:$0xff]
      %v155 = vld [vmem:[%s1 + $0x58] sm:$0xff]
      %v156 = vld [vmem:[%s138] sm:$0xff]
      %v157 = vld [vmem:[%s138 + $0x8] sm:$0xff]
      %v158 = vld [vmem:[%s138 + $0x10] sm:$0xff]
      %v159 = vld [vmem:[%s138 + $0x18] sm:$0xff]
      %v160 = vld [vmem:[%s138 + $0x20] sm:$0xff]
      %v161 = vld [vmem:[%s138 + $0x28] sm:$0xff]
      %v162 = vld [vmem:[%s138 + $0x30] sm:$0xff]
      %v163 = vld [vmem:[%s138 + $0x38] sm:$0xff]
      %v164 = vld [vmem:[%s138 + $0x40] sm:$0xff]
      %v165 = vld [vmem:[%s138 + $0x48] sm:$0xff]
      %v166 = vld [vmem:[%s138 + $0x50] sm:$0xff]
      %v167 = vld [vmem:[%s138 + $0x58] sm:$0xff]
      %v168 = vld [vmem:[%s138 + $0x60] sm:$0xff]
      %v169 = vld [vmem:[%s138 + $0x68] sm:$0xff]
      %v170 = vld [vmem:[%s138 + $0x70] sm:$0xff]
      %v171 = vld [vmem:[%s138 + $0x78] sm:$0xff]
      %v172 = vld [vmem:[%s138 + $0x80] sm:$0xff]
      %v173 = vld [vmem:[%s138 + $0x88] sm:$0xff]
      %v174 = vld [vmem:[%s138 + $0x90] sm:$0xff]
      %v175 = vld [vmem:[%s138 + $0x98] sm:$0xff]
      %v176 = vld [vmem:[%s138 + $0xa0] sm:$0xff]
      %v177 = vld [vmem:[%s138 + $0xa8] sm:$0xff]
      %v178 = vld [vmem:[%s138 + $0xb0] sm:$0xff]
      %v179 = vld [vmem:[%s138 + $0xb8] sm:$0xff]
      %v180 = vld [vmem:[%s138 + $0xc0] sm:$0xff]
      %v181 = vld [vmem:[%s138 + $0xc8] sm:$0xff]
      %v182 = vld [vmem:[%s138 + $0xd0] sm:$0xff]
      %v183 = vld [vmem:[%s138 + $0xd8] sm:$0xff]
      %v184 = vld [vmem:[%s138 + $0xe0] sm:$0xff]
      %v185 = vld [vmem:[%s138 + $0xe8] sm:$0xff]
      %v186 = vld [vmem:[%s138 + $0xf0] sm:$0xff]
      %v187 = vld [vmem:[%s138 + $0xf8] sm:$0xff]
      %v188 = vld [vmem:[%s138 + $0x100] sm:$0xff]
      %v189 = vld [vmem:[%s138 + $0x108] sm:$0xff]
      %v190 = vld [vmem:[%s138 + $0x110] sm:$0xff]
      %v191 = vld [vmem:[%s138 + $0x118] sm:$0xff]
      %v192 = vld [vmem:[%s138 + $0x120] sm:$0xff]
      %v193 = vld [vmem:[%s138 + $0x128] sm:$0xff]
      %v194 = vld [vmem:[%s138 + $0x130] sm:$0xff]
      %v195 = vld [vmem:[%s138 + $0x138] sm:$0xff]
      %v196 = vld [vmem:[%s138 + $0x140] sm:$0xff]
      %v197 = vld [vmem:[%s138 + $0x148] sm:$0xff]
      %v198 = vld [vmem:[%s138 + $0x150] sm:$0xff]
      %v199 = vld [vmem:[%s138 + $0x158] sm:$0xff]
      %v200 = vld [vmem:[%s138 + $0x160] sm:$0xff]
      %v201 = vld [vmem:[%s138 + $0x168] sm:$0xff]
      %v202 = vld [vmem:[%s138 + $0x170] sm:$0xff]
      %v203 = vld [vmem:[%s138 + $0x178] sm:$0xff]
      %v204 = vld [vmem:[%s138 + $0x180] sm:$0xff]
      %v205 = vld [vmem:[%s138 + $0x188] sm:$0xff]
      %v206 = vld [vmem:[%s138 + $0x190] sm:$0xff]
      %v207 = vld [vmem:[%s138 + $0x198] sm:$0xff]
      %v208 = vld [vmem:[%s138 + $0x1a0] sm:$0xff]
      %v209 = vld [vmem:[%s138 + $0x1a8] sm:$0xff]
      %v210 = vld [vmem:[%s138 + $0x1b0] sm:$0xff]
      %v211 = vld [vmem:[%s138 + $0x1b8] sm:$0xff]
      %v212 = vld [vmem:[%s138 + $0x1c0] sm:$0xff]
      %v213 = vld [vmem:[%s138 + $0x1c8] sm:$0xff]
      %v214 = vld [vmem:[%s138 + $0x1d0] sm:$0xff]
      %v215 = vld [vmem:[%s138 + $0x1d8] sm:$0xff]
      %v216 = vld [vmem:[%s138 + $0x1e0] sm:$0xff]
      %v217 = vld [vmem:[%s138 + $0x1e8] sm:$0xff]
      %v218 = vld [vmem:[%s138 + $0x1f0] sm:$0xff]
      %v219 = vld [vmem:[%s138 + $0x1f8] sm:$0xff]
      %v220 = vld [vmem:[%s138 + $0x200] sm:$0xff]
      %v221 = vld [vmem:[%s138 + $0x208] sm:$0xff]
      %v222 = vld [vmem:[%s138 + $0x210] sm:$0xff]
      %v223 = vld [vmem:[%s138 + $0x218] sm:$0xff]
      %v224 = vld [vmem:[%s138 + $0x220] sm:$0xff]
      %v225 = vld [vmem:[%s138 + $0x228] sm:$0xff]
      %v226 = vld [vmem:[%s138 + $0x230] sm:$0xff]
      %v227 = vld [vmem:[%s138 + $0x238] sm:$0xff]
      %vm228 = vcmask 261120
      %v230 = vsel %vm228, %v146, 0
      %v233 = vsel %vm228, %v149, 0
      %v236 = vsel %vm228, %v152, 0
      %v239 = vsel %vm228, %v155, 0
      %241 = vmatprep.subr.mxu0 %v187
      %242 = vmatpush1.msra.mxu0 %v186
      %243 = vmatprep.subr.mxu0 %v185
      %244 = vmatpush1.msra.mxu0 %v184
      %245 = vmatprep.subr.mxu0 %v183
      %246 = vmatpush1.msra.mxu0 %v182
      %247 = vmatprep.subr.mxu0 %v181
      %248 = vmatpush1.msra.mxu0 %v180
      %249 = vmatprep.subr.mxu0 %v179
      %250 = vmatpush1.msra.mxu0 %v178
      %251 = vmatprep.subr.mxu0 %v177
      %252 = vmatpush1.msra.mxu0 %v176
      %253 = vmatprep.subr.mxu0 %v175
      %254 = vmatpush1.msra.mxu0 %v174
      %255 = vmatprep.subr.mxu0 %v173
      %256 = vmatpush1.msra.mxu0 %v172
      %257 = vmatprep.subr.mxu0 %v171
      %258 = vmatpush1.msra.mxu0 %v170
      %259 = vmatprep.subr.mxu0 %v169
      %260 = vmatpush1.msra.mxu0 %v168
      %261 = vmatprep.subr.mxu0 %v167
      %262 = vmatpush1.msra.mxu0 %v166
      %263 = vmatprep.subr.mxu0 %v165
      %264 = vmatpush1.msra.mxu0 %v164
      %265 = vmatprep.subr.mxu0 %v163
      %266 = vmatpush1.msra.mxu0 %v162
      %267 = vmatprep.subr.mxu0 %v161
      %268 = vmatpush1.msra.mxu0 %v160
      %269 = vmatprep.subr.mxu0 %v159
      %270 = vmatpush1.msra.mxu0 %v158
      %271 = vmatprep.subr.mxu0 %v157
      %272 = vmatpush1.msra.mxu0 %v156
      %273 = vmatprep.subr.mxu0 %v219
      %274 = vmatpush2.msra.mxu0 %v218
      %275 = vmatprep.subr.mxu0 %v217
      %276 = vmatpush2.msra.mxu0 %v216
      %277 = vmatprep.subr.mxu0 %v215
      %278 = vmatpush2.msra.mxu0 %v214
      %279 = vmatprep.subr.mxu0 %v213
      %280 = vmatpush2.msra.mxu0 %v212
      %281 = vmatprep.subr.mxu0 %v211
      %282 = vmatpush2.msra.mxu0 %v210
      %283 = vmatprep.subr.mxu0 %v209
      %284 = vmatpush2.msra.mxu0 %v208
      %285 = vmatprep.subr.mxu0 %v207
      %286 = vmatpush2.msra.mxu0 %v206
      %287 = vmatprep.subr.mxu0 %v205
      %288 = vmatpush2.msra.mxu0 %v204
      %289 = vmatprep.subr.mxu0 %v203
      %290 = vmatpush2.msra.mxu0 %v202
      %291 = vmatprep.subr.mxu0 %v201
      %292 = vmatpush2.msra.mxu0 %v200
      %293 = vmatprep.subr.mxu0 %v199
      %294 = vmatpush2.msra.mxu0 %v198
      %295 = vmatprep.subr.mxu0 %v197
      %296 = vmatpush2.msra.mxu0 %v196
      %297 = vmatprep.subr.mxu0 %v195
      %298 = vmatpush2.msra.mxu0 %v194
      %299 = vmatprep.subr.mxu0 %v193
      %300 = vmatpush2.msra.mxu0 %v192
      %301 = vmatprep.subr.mxu0 %v191
      %302 = vmatpush2.msra.mxu0 %v190
      %303 = vmatprep.subr.mxu0 %v189
      %304 = vmatpush2.msra.mxu0 %v188
      %305 = vmatprep.mubr.f32.mxu0 %v145
      %306 = vmatmul.mubr.f32.gmra.mxu0 %v144
      %v307 = vpop.f32.mrf.mxu0
      %v308 = vadd.f32 0.0, %v307
      %v309 = vpop.f32.mrf.mxu0
      %v310 = vadd.f32 0.0, %v309
      %311 = vmatprep.mubr.f32.mxu0 %v148
      %312 = vmatmul.mubr.f32.gmra.mxu0 %v147
      %v313 = vpop.f32.mrf.mxu0
      %v314 = vadd.f32 0.0, %v313
      %v315 = vpop.f32.mrf.mxu0
      %v316 = vadd.f32 0.0, %v315
      %317 = vmatprep.mubr.f32.mxu0 %v151
      %318 = vmatmul.mubr.f32.gmra.mxu0 %v150
      %v319 = vpop.f32.mrf.mxu0
      %v320 = vadd.f32 0.0, %v319
      %v321 = vpop.f32.mrf.mxu0
      %v322 = vadd.f32 0.0, %v321
      %323 = vmatprep.mubr.f32.mxu0 %v154
      %324 = vmatmul.mubr.f32.gmra.mxu0 %v153
      %v325 = vpop.f32.mrf.mxu0
      %v326 = vadd.f32 0.0, %v325
      %v327 = vpop.f32.mrf.mxu0
      %v328 = vadd.f32 0.0, %v327
      %329 = vdwg.mxu0
      %330 = vmatprep.subr.mxu0 0.0
      %331 = vmatpush1.msra.mxu0 0.0
      %332 = vmatprep.subr.mxu0 0.0
      %333 = vmatpush1.msra.mxu0 0.0
      %334 = vmatprep.subr.mxu0 0.0
      %335 = vmatpush1.msra.mxu0 0.0
      %336 = vmatprep.subr.mxu0 0.0
      %337 = vmatpush1.msra.mxu0 0.0
      %338 = vmatprep.subr.mxu0 0.0
      %339 = vmatpush1.msra.mxu0 0.0
      %340 = vmatprep.subr.mxu0 0.0
      %341 = vmatpush1.msra.mxu0 0.0
      %342 = vmatprep.subr.mxu0 0.0
      %343 = vmatpush1.msra.mxu0 0.0
      %344 = vmatprep.subr.mxu0 0.0
      %345 = vmatpush1.msra.mxu0 0.0
      %346 = vmatprep.subr.mxu0 0.0
      %347 = vmatpush1.msra.mxu0 0.0
      %348 = vmatprep.subr.mxu0 0.0
      %349 = vmatpush1.msra.mxu0 0.0
      %350 = vmatprep.subr.mxu0 0.0
      %351 = vmatpush1.msra.mxu0 0.0
      %352 = vmatprep.subr.mxu0 0.0
      %353 = vmatpush1.msra.mxu0 0.0
      %354 = vmatprep.subr.mxu0 %v227
      %355 = vmatpush1.msra.mxu0 %v226
      %356 = vmatprep.subr.mxu0 %v225
      %357 = vmatpush1.msra.mxu0 %v224
      %358 = vmatprep.subr.mxu0 %v223
      %359 = vmatpush1.msra.mxu0 %v222
      %360 = vmatprep.subr.mxu0 %v221
      %361 = vmatpush1.msra.mxu0 %v220
      %362 = vmatprep.subr.mxu0 0.0
      %363 = vmatpush2.msra.mxu0 0.0
      %364 = vmatprep.subr.mxu0 0.0
      %365 = vmatpush2.msra.mxu0 0.0
      %366 = vmatprep.subr.mxu0 0.0
      %367 = vmatpush2.msra.mxu0 0.0
      %368 = vmatprep.subr.mxu0 0.0
      %369 = vmatpush2.msra.mxu0 0.0
      %370 = vmatprep.subr.mxu0 0.0
      %371 = vmatpush2.msra.mxu0 0.0
      %372 = vmatprep.subr.mxu0 0.0
      %373 = vmatpush2.msra.mxu0 0.0
      %374 = vmatprep.subr.mxu0 0.0
      %375 = vmatpush2.msra.mxu0 0.0
      %376 = vmatprep.subr.mxu0 0.0
      %377 = vmatpush2.msra.mxu0 0.0
      %378 = vmatprep.subr.mxu0 0.0
      %379 = vmatpush2.msra.mxu0 0.0
      %380 = vmatprep.subr.mxu0 0.0
      %381 = vmatpush2.msra.mxu0 0.0
      %382 = vmatprep.subr.mxu0 0.0
      %383 = vmatpush2.msra.mxu0 0.0
      %384 = vmatprep.subr.mxu0 0.0
      %385 = vmatpush2.msra.mxu0 0.0
      %386 = vmatprep.subr.mxu0 0.0
      %387 = vmatpush2.msra.mxu0 0.0
      %388 = vmatprep.subr.mxu0 0.0
      %389 = vmatpush2.msra.mxu0 0.0
      %390 = vmatprep.subr.mxu0 0.0
      %391 = vmatpush2.msra.mxu0 0.0
      %392 = vmatprep.subr.mxu0 0.0
      %393 = vmatpush2.msra.mxu0 0.0
      %394 = vmatprep.mubr.f32.mxu0 0.0
      %395 = vmatmul.mubr.f32.gmra.mxu0 %v230
      %v396 = vpop.f32.mrf.mxu0
      %v397 = vadd.f32 %v308, %v396
      %v398 = vpop.f32.mrf.mxu0
      %v399 = vadd.f32 %v310, %v398
      %400 = vmatprep.mubr.f32.mxu0 0.0
      %401 = vmatmul.mubr.f32.gmra.mxu0 %v233
      %v402 = vpop.f32.mrf.mxu0
      %v403 = vadd.f32 %v314, %v402
      %v404 = vpop.f32.mrf.mxu0
      %v405 = vadd.f32 %v316, %v404
      %406 = vmatprep.mubr.f32.mxu0 0.0
      %407 = vmatmul.mubr.f32.gmra.mxu0 %v236
      %v408 = vpop.f32.mrf.mxu0
      %v409 = vadd.f32 %v320, %v408
      %v410 = vpop.f32.mrf.mxu0
      %v411 = vadd.f32 %v322, %v410
      %412 = vmatprep.mubr.f32.mxu0 0.0
      %413 = vmatmul.mubr.f32.gmra.mxu0 %v239
      %v414 = vpop.f32.mrf.mxu0
      %v415 = vadd.f32 %v326, %v414
      %v416 = vpop.f32.mrf.mxu0
      %v417 = vadd.f32 %v328, %v416
      %418 = vdwg.mxu0
      %419 = vst [vmem:[%s143] sm:$0xff] %v397
      %420 = vst [vmem:[%s143 + $0x8] sm:$0xff] %v399
      %421 = vst [vmem:[%s143 + $0x10] sm:$0xff] %v403
      %422 = vst [vmem:[%s143 + $0x18] sm:$0xff] %v405
      %423 = vst [vmem:[%s143 + $0x20] sm:$0xff] %v409
      %424 = vst [vmem:[%s143 + $0x28] sm:$0xff] %v411
      %425 = vst [vmem:[%s143 + $0x30] sm:$0xff] %v415
      %426 = vst [vmem:[%s143 + $0x38] sm:$0xff] %v417
      %p427 = scmp.lt.s32.totalorder %s13, 1
      %s428 = scalar_select %p427, %s13, 1
      %s429 = smul.addr %s428, 8
      %s430 = smul.addr %s429, 8
      %s431 = scalar_lea.vmem %s2, %s430
      // Predicated region
      $region29: #{conv2d_3x3_same_nobias.1} parent=27 // pred_check
        %p432 = pneg %p78
      $region30: #{conv2d_3x3_same_nobias.1} parent=27 // pred_check_branch
        %434 = sbr.rel (%p432) target = $region32
      $region31: #{conv2d_3x3_same_nobias.1} parent=27 // pred_region
        _
      $region32: #{conv2d_3x3_same_nobias.1} parent=27 // pred_fallthru
        _
    $region28: #{conv2d_3x3_same_nobias.1} parent=5 // pred_fallthru
      _
    %p435 = scmp.le.s32.totalorder 2, %s8
    // Predicated region
    $region33: #{conv2d_3x3_same_nobias.1} parent=5 // pred_check
      %p436 = pneg %p435
    $region34: #{conv2d_3x3_same_nobias.1} parent=5 // pred_check_branch
      %438 = sbr.rel (%p436) target = $region36
    $region35: #{conv2d_3x3_same_nobias.1} parent=5 // pred_region
      %s439 = ssub.s32 %s8, 2
      // Predicated region
      $region37: #{conv2d_3x3_same_nobias.1} parent=35 // pred_check
        %p440 = pneg %p84
      $region38: #{conv2d_3x3_same_nobias.1} parent=35 // pred_check_branch
        %442 = sbr.rel (%p440) target = $region40
      $region39: #{conv2d_3x3_same_nobias.1} parent=35 // pred_region
        %p443 = scmp.lt.s32.totalorder %s14, 1
        %s444 = scalar_select %p443, %s14, 1
        %s445 = smul.addr %s444, 8
        %s446 = smul.addr %s445, 8
        %s447 = scalar_lea.vmem %s2, %s446
      $region40: #{conv2d_3x3_same_nobias.1} parent=35 // pred_fallthru
        _
    $region36: #{conv2d_3x3_same_nobias.1} parent=5 // pred_fallthru
      _
  $region6: #{conv2d_3x3_same_nobias.1} parent=0 // loop_footer
    %s12 = sadd.s32 1, %s8
  $region7: #{conv2d_3x3_same_nobias.1} parent=0 // loop_footer_branch
    %7 = sbr.rel target = $region3
  $region8: #{conv2d_3x3_same_nobias.1} parent=0 // loop_exit
    _

</llo_original>
